<compile_context>
chip_gen: v7x
topology: tpu7x:2x2x1
jax: 0.10.0
libtpu: 0.0.40
codegen_flags: <defaults>
</compile_context>

<pallas_src>
import math

import jax
import jax.numpy as jnp
from jax.experimental import pallas as pl
from jax.experimental.pallas import tpu as pltpu


def edge_network_kernel(atom_t_ref, w_aug_ref, bond_aug_ref, nbr_ref, src_ref, out_ref):
    D, N = atom_t_ref.shape
    tE = bond_aug_ref.shape[1]

    @pl.when(pl.program_id(0) == 0)
    def _():
        out_ref[...] = jnp.zeros_like(out_ref)

    atom_t = atom_t_ref[...]        # [D, N]     f32
    bond_aug = bond_aug_ref[...]    # [B+1, tE]  f32 (last row = 1 for real edges)
    w_aug = w_aug_ref[...]          # [D*D, B+1] f32 (row j*D+i = weight[:, i*D+j]; last col = bias)
    nbr = nbr_ref[...]              # [1, tE]    i32 (pair_indices[:, 1], padded with -1)
    src = src_ref[...]              # [tE, 1]    i32 (pair_indices[:, 0], padded with -1)

    # Projection with the edge dimension on lanes; bias fused via the ones row.
    proj_t = jnp.dot(w_aug, bond_aug, preferred_element_type=jnp.float32)        # [D*D, tE]

    # Gather neighbor atom features via a one-hot matmul: [D, N] @ [N, tE] -> [D, tE].
    atom_iota_col = jax.lax.broadcasted_iota(jnp.int32, (N, tE), 0)
    gather_oh = (atom_iota_col == nbr).astype(jnp.float32)                        # [N, tE]
    neighbor_t = jnp.dot(atom_t, gather_oh, preferred_element_type=jnp.float32)   # [D, tE]

    # transformed[i, e] = sum_j proj[e, i*D + j] * neighbor[e, j].
    # With the column-permuted weight, rows j*D:(j+1)*D of proj_t hold
    # proj[:, i*D + j] for every i, so the batched matvec is D aligned FMAs;
    # tree-sum the partial products to shorten the dependency chain.
    parts = [proj_t[j * D:(j + 1) * D, :] * neighbor_t[j:j + 1, :] for j in range(D)]
    while len(parts) > 1:
        nxt = [parts[k] + parts[k + 1] for k in range(0, len(parts) - 1, 2)]
        if len(parts) % 2:
            nxt.append(parts[-1])
        parts = nxt
    transformed_t = parts[0]                                                       # [D, tE]

    # Scatter-add into atoms via a pre-oriented one-hot matmul:
    # [D, tE] @ [tE, N] -> [D, N], accumulated across edge tiles.
    atom_iota_row = jax.lax.broadcasted_iota(jnp.int32, (tE, N), 1)
    scatter_oh = (src == atom_iota_row).astype(jnp.float32)                        # [tE, N]
    out_ref[...] += jnp.dot(transformed_t, scatter_oh, preferred_element_type=jnp.float32)


def _pick_tile_e(num_edges, num_atoms, atom_dim, bond_dim, budget_bytes=24 * 1024 * 1024):
    """Largest edge tile (multiple of 128, capped at 2048) whose per-edge f32
    working set fits the budget.  Per edge column:
      - two one-hots + proj tile + small intermediates:   4*(2N + D*D + 3D + 4)
      - double-buffered bond tile (B+1 rows):             2 * 4*(B+1)
      - double-buffered nbr tile ([1,tE] -> 8 sublanes):  2 * 4*8
      - double-buffered src tile ([tE,1] -> 128 lanes):   2 * 4*128
    Budget is conservative so the kernel is safe on v7x (64 MiB physical VMEM)
    as well as v5e/v6e."""
    dd = atom_dim * atom_dim
    per_col = (4 * (2 * num_atoms + dd + 3 * atom_dim + 4)
               + 2 * 4 * (bond_dim + 1)
               + 2 * 4 * 8
               + 2 * 4 * 128)
    te = budget_bytes // max(per_col, 1)
    te = max(128, min(2048, (te // 128) * 128))
    te = min(te, max(128, ((num_edges + 127) // 128) * 128))
    return te


def edge_network_forward(atom_features, bond_features, pair_indices, weight, bias,
                         *, tile_e=None, vmem_limit_bytes=48 * 1024 * 1024):
    num_atoms, atom_dim = atom_features.shape
    num_bonds, bond_dim = bond_features.shape
    dd = atom_dim * atom_dim
    assert weight.shape == (bond_dim, dd)

    if tile_e is None:
        tile_e = _pick_tile_e(num_bonds, num_atoms, atom_dim, bond_dim)
    num_tiles = pl.cdiv(num_bonds, tile_e)
    e_pad = num_tiles * tile_e

    f32 = jnp.float32
    # Transposed / column-permuted operands (cheap XLA-side layout plumbing).
    atom_t = atom_features.astype(f32).T                                          # [D, N]
    w_perm = jnp.transpose(weight.astype(f32).reshape(bond_dim, atom_dim, atom_dim),
                           (2, 1, 0)).reshape(dd, bond_dim)                        # [D*D, B]
    b_col = jnp.transpose(bias.astype(f32).reshape(atom_dim, atom_dim)).reshape(dd, 1)
    w_aug = jnp.concatenate([w_perm, b_col], axis=1)                               # [D*D, B+1]

    bond_aug = jnp.zeros((bond_dim + 1, e_pad), f32)
    bond_aug = bond_aug.at[:bond_dim, :num_bonds].set(bond_features.astype(f32).T)
    bond_aug = bond_aug.at[bond_dim, :num_bonds].set(1.0)                          # ones row -> bias
    nbr = jnp.full((1, e_pad), -1, jnp.int32).at[0, :num_bonds].set(
        pair_indices[:, 1].astype(jnp.int32))
    src = jnp.full((e_pad, 1), -1, jnp.int32).at[:num_bonds, 0].set(
        pair_indices[:, 0].astype(jnp.int32))

    flops = 2 * num_bonds * ((bond_dim + 1) * dd + 2 * num_atoms * atom_dim + dd)
    bytes_accessed = 4 * (2 * num_atoms * atom_dim + num_bonds * (bond_dim + 1)
                          + dd * (bond_dim + 1) + 2 * num_bonds)

    out_t = pl.pallas_call(
        edge_network_kernel,
        out_shape=jax.ShapeDtypeStruct((atom_dim, num_atoms), f32),
        grid=(num_tiles,),
        in_specs=[
            pl.BlockSpec((atom_dim, num_atoms), lambda i: (0, 0)),    # atom_t (resident)
            pl.BlockSpec((dd, bond_dim + 1), lambda i: (0, 0)),       # w_aug  (resident)
            pl.BlockSpec((bond_dim + 1, tile_e), lambda i: (0, i)),   # bond tile (+ones row)
            pl.BlockSpec((1, tile_e), lambda i: (0, i)),              # nbr tile
            pl.BlockSpec((tile_e, 1), lambda i: (i, 0)),              # src tile
        ],
        out_specs=pl.BlockSpec((atom_dim, num_atoms), lambda i: (0, 0)),  # accumulator
        compiler_params=pltpu.CompilerParams(
            dimension_semantics=("arbitrary",),
            vmem_limit_bytes=vmem_limit_bytes,
        ),
        cost_estimate=pl.CostEstimate(
            flops=flops, transcendentals=0, bytes_accessed=bytes_accessed),
    )(atom_t, w_aug, bond_aug, nbr, src)

    return out_t.T.astype(atom_features.dtype)


def edge_network_reference(atom_features, bond_features, pair_indices, weight, bias):
    D = atom_features.shape[1]
    proj = bond_features @ weight + bias                      # [E, D*D]
    proj3 = proj.reshape(-1, D, D)                            # [E, D, D]
    nbr = atom_features[pair_indices[:, 1]]                   # [E, D]
    transformed = jnp.einsum("eij,ej->ei", proj3, nbr)        # [E, D]
    agg = jnp.zeros_like(atom_features).at[pair_indices[:, 0]].add(transformed)
    return agg


def _make_inputs(key, num_atoms, num_bonds, atom_dim, bond_dim):
    k_atom, k_bond, k_pair, k_w = jax.random.split(key, 4)
    atom_features = jax.random.normal(k_atom, (num_atoms, atom_dim), dtype=jnp.float32)
    bond_features = jax.random.normal(k_bond, (num_bonds, bond_dim), dtype=jnp.float32)
    pair_indices = jax.random.randint(k_pair, (num_bonds, 2), 0, num_atoms, dtype=jnp.int32)
    # nn.init.xavier_uniform_ for kernel [bond_dim, atom_dim*atom_dim]; bias = zeros.
    fan_in, fan_out = bond_dim, atom_dim * atom_dim
    bound = math.sqrt(6.0 / (fan_in + fan_out))
    weight = jax.random.uniform(
        k_w, (bond_dim, atom_dim * atom_dim), minval=-bound, maxval=bound, dtype=jnp.float32
    )
    bias = jnp.zeros((atom_dim * atom_dim,), dtype=jnp.float32)
    return atom_features, bond_features, pair_indices, weight, bias


if __name__ == "__main__":
    key = jax.random.PRNGKey(0)
    k1, k2 = jax.random.split(key)

    # Case 1: original toy shapes (single edge tile, exercises padding to 128).
    a, b, p, w, bi = _make_inputs(k1, num_atoms=16, num_bonds=32, atom_dim=8, bond_dim=16)
    out = jax.block_until_ready(edge_network_forward(a, b, p, w, bi))
    ref = edge_network_reference(a, b, p, w, bi)
    assert out.shape == (16, 8)
    assert jnp.allclose(out, ref, atol=1e-4, rtol=1e-4), "case 1: Pallas kernel mismatch"

    # Case 2: non-aligned E with a forced small tile -> multi-step grid
    # (exercises the accumulator init/accumulate path and -1 padded edges).
    a, b, p, w, bi = _make_inputs(k2, num_atoms=24, num_bonds=200, atom_dim=8, bond_dim=24)
    out = jax.block_until_ready(edge_network_forward(a, b, p, w, bi, tile_e=128))
    ref = edge_network_reference(a, b, p, w, bi)
    assert out.shape == (24, 8)
    assert jnp.allclose(out, ref, atol=1e-4, rtol=1e-4), "case 2: Pallas kernel mismatch"

    print("KERNEL_OK")
</pallas_src>

<mosaic_0001>
module attributes {stable_mosaic.version = 11 : i64} {
  func.func @edge_network_kernel(%arg0: i32, %arg1: memref<8x16xf32, #tpu.memory_space<vmem>>, %arg2: memref<64x17xf32, #tpu.memory_space<vmem>>, %arg3: memref<17x128xf32, #tpu.memory_space<vmem>>, %arg4: memref<1x128xi32, #tpu.memory_space<vmem>>, %arg5: memref<128x1xi32, #tpu.memory_space<vmem>>, %arg6: memref<8x16xf32, #tpu.memory_space<vmem>>) attributes {dimension_semantics = [#tpu.dimension_semantics<arbitrary>], iteration_bounds = array<i64: 1>, scalar_prefetch = 0 : i64, scratch_operands = 0 : i64, tpu.core_type = #tpu.core_type<tc>, window_params = [{pipeline_mode = #tpu.pipeline_mode<synchronous>, transform_indices = @transform_0, window_bounds = array<i64: 8, 16>}, {pipeline_mode = #tpu.pipeline_mode<synchronous>, transform_indices = @transform_1, window_bounds = array<i64: 64, 17>}, {transform_indices = @transform_2, window_bounds = array<i64: 17, 128>}, {transform_indices = @transform_3, window_bounds = array<i64: 1, 128>}, {transform_indices = @transform_4, window_bounds = array<i64: 128, 1>}, {pipeline_mode = #tpu.pipeline_mode<synchronous>, transform_indices = @transform_5, window_bounds = array<i64: 8, 16>}]} {
    %c0_i32 = arith.constant 0 : i32
    %0 = arith.cmpi eq, %arg0, %c0_i32 : i32
    %1 = arith.extui %0 : i1 to i32
    %c0_i32_0 = arith.constant 0 : i32
    %2 = arith.cmpi ne, %1, %c0_i32_0 : i32
    scf.if %2 {
      %cst_16 = arith.constant 0.000000e+00 : f32
      %63 = vector.broadcast %cst_16 : f32 to vector<8x16xf32>
      %c0_17 = arith.constant 0 : index
      %c0_18 = arith.constant 0 : index
      %64 = vector.load %arg6[%c0_17, %c0_18] : memref<8x16xf32, #tpu.memory_space<vmem>>, vector<8x16xf32>
      tpu.vector_store %arg6[%c0_17, %c0_18], %63 {strides = array<i32>} : memref<8x16xf32, #tpu.memory_space<vmem>>, vector<8x16xf32>,
    } else {
    }
    %c0 = arith.constant 0 : index
    %c0_1 = arith.constant 0 : index
    %3 = vector.load %arg1[%c0, %c0_1] : memref<8x16xf32, #tpu.memory_space<vmem>>, vector<8x16xf32>
    %c0_2 = arith.constant 0 : index
    %c0_3 = arith.constant 0 : index
    %4 = vector.load %arg3[%c0_2, %c0_3] : memref<17x128xf32, #tpu.memory_space<vmem>>, vector<17x128xf32>
    %c0_4 = arith.constant 0 : index
    %c0_5 = arith.constant 0 : index
    %5 = vector.load %arg2[%c0_4, %c0_5] : memref<64x17xf32, #tpu.memory_space<vmem>>, vector<64x17xf32>
    %c0_6 = arith.constant 0 : index
    %c0_7 = arith.constant 0 : index
    %6 = vector.load %arg4[%c0_6, %c0_7] : memref<1x128xi32, #tpu.memory_space<vmem>>, vector<1x128xi32>
    %c0_8 = arith.constant 0 : index
    %c0_9 = arith.constant 0 : index
    %7 = vector.load %arg5[%c0_8, %c0_9] : memref<128x1xi32, #tpu.memory_space<vmem>>, vector<128x1xi32>
    %cst = arith.constant dense<0.000000e+00> : vector<64x128xf32>
    %8 = tpu.matmul %5, %4, %cst {dimension_numbers = #tpu.dot_dimension_numbers<[1], [0], [0], [1], [0, 0, 1, 1], [], []>} : vector<64x17xf32>, vector<17x128xf32>, vector<64x128xf32> -> vector<64x128xf32>
    %9 = tpu.iota {dimensions = array<i32: 0>} : vector<16x128xi32>
    %10 = vector.broadcast %6 : vector<1x128xi32> to vector<16x128xi32>
    %11 = arith.cmpi eq, %9, %10 : vector<16x128xi32>
    %12 = arith.extui %11 : vector<16x128xi1> to vector<16x128xi32>
    %13 = arith.sitofp %12 : vector<16x128xi32> to vector<16x128xf32>
    %cst_10 = arith.constant dense<0.000000e+00> : vector<8x128xf32>
    %14 = tpu.matmul %3, %13, %cst_10 {dimension_numbers = #tpu.dot_dimension_numbers<[1], [0], [0], [1], [0, 0, 1, 1], [], []>} : vector<8x16xf32>, vector<16x128xf32>, vector<8x128xf32> -> vector<8x128xf32>
    %15 = vector.extract_strided_slice %8 {offsets = [0, 0], sizes = [8, 128], strides = [1, 1]} : vector<64x128xf32> to vector<8x128xf32>
    %16 = vector.extract_strided_slice %14 {offsets = [0, 0], sizes = [1, 128], strides = [1, 1]} : vector<8x128xf32> to vector<1x128xf32>
    %17 = vector.broadcast %16 : vector<1x128xf32> to vector<8x128xf32>
    %18 = arith.mulf %15, %17 : vector<8x128xf32>
    %19 = vector.extract_strided_slice %8 {offsets = [8, 0], sizes = [8, 128], strides = [1, 1]} : vector<64x128xf32> to vector<8x128xf32>
    %20 = vector.extract_strided_slice %14 {offsets = [1, 0], sizes = [1, 128], strides = [1, 1]} : vector<8x128xf32> to vector<1x128xf32>
    %21 = vector.broadcast %20 : vector<1x128xf32> to vector<8x128xf32>
    %22 = arith.mulf %19, %21 : vector<8x128xf32>
    %23 = vector.extract_strided_slice %8 {offsets = [16, 0], sizes = [8, 128], strides = [1, 1]} : vector<64x128xf32> to vector<8x128xf32>
    %24 = vector.extract_strided_slice %14 {offsets = [2, 0], sizes = [1, 128], strides = [1, 1]} : vector<8x128xf32> to vector<1x128xf32>
    %25 = vector.broadcast %24 : vector<1x128xf32> to vector<8x128xf32>
    %26 = arith.mulf %23, %25 : vector<8x128xf32>
    %27 = vector.extract_strided_slice %8 {offsets = [24, 0], sizes = [8, 128], strides = [1, 1]} : vector<64x128xf32> to vector<8x128xf32>
    %28 = vector.extract_strided_slice %14 {offsets = [3, 0], sizes = [1, 128], strides = [1, 1]} : vector<8x128xf32> to vector<1x128xf32>
    %29 = vector.broadcast %28 : vector<1x128xf32> to vector<8x128xf32>
    %30 = arith.mulf %27, %29 : vector<8x128xf32>
    %31 = vector.extract_strided_slice %8 {offsets = [32, 0], sizes = [8, 128], strides = [1, 1]} : vector<64x128xf32> to vector<8x128xf32>
    %32 = vector.extract_strided_slice %14 {offsets = [4, 0], sizes = [1, 128], strides = [1, 1]} : vector<8x128xf32> to vector<1x128xf32>
    %33 = vector.broadcast %32 : vector<1x128xf32> to vector<8x128xf32>
    %34 = arith.mulf %31, %33 : vector<8x128xf32>
    %35 = vector.extract_strided_slice %8 {offsets = [40, 0], sizes = [8, 128], strides = [1, 1]} : vector<64x128xf32> to vector<8x128xf32>
    %36 = vector.extract_strided_slice %14 {offsets = [5, 0], sizes = [1, 128], strides = [1, 1]} : vector<8x128xf32> to vector<1x128xf32>
    %37 = vector.broadcast %36 : vector<1x128xf32> to vector<8x128xf32>
    %38 = arith.mulf %35, %37 : vector<8x128xf32>
    %39 = vector.extract_strided_slice %8 {offsets = [48, 0], sizes = [8, 128], strides = [1, 1]} : vector<64x128xf32> to vector<8x128xf32>
    %40 = vector.extract_strided_slice %14 {offsets = [6, 0], sizes = [1, 128], strides = [1, 1]} : vector<8x128xf32> to vector<1x128xf32>
    %41 = vector.broadcast %40 : vector<1x128xf32> to vector<8x128xf32>
    %42 = arith.mulf %39, %41 : vector<8x128xf32>
    %43 = vector.extract_strided_slice %8 {offsets = [56, 0], sizes = [8, 128], strides = [1, 1]} : vector<64x128xf32> to vector<8x128xf32>
    %44 = vector.extract_strided_slice %14 {offsets = [7, 0], sizes = [1, 128], strides = [1, 1]} : vector<8x128xf32> to vector<1x128xf32>
    %45 = vector.broadcast %44 : vector<1x128xf32> to vector<8x128xf32>
    %46 = arith.mulf %43, %45 : vector<8x128xf32>
    %47 = arith.addf %18, %22 : vector<8x128xf32>
    %48 = arith.addf %26, %30 : vector<8x128xf32>
    %49 = arith.addf %34, %38 : vector<8x128xf32>
    %50 = arith.addf %42, %46 : vector<8x128xf32>
    %51 = arith.addf %47, %48 : vector<8x128xf32>
    %52 = arith.addf %49, %50 : vector<8x128xf32>
    %53 = arith.addf %51, %52 : vector<8x128xf32>
    %54 = tpu.iota {dimensions = array<i32: 1>} : vector<128x16xi32>
    %55 = vector.broadcast %7 : vector<128x1xi32> to vector<128x16xi32>
    %56 = arith.cmpi eq, %55, %54 : vector<128x16xi32>
    %57 = arith.extui %56 : vector<128x16xi1> to vector<128x16xi32>
    %58 = arith.sitofp %57 : vector<128x16xi32> to vector<128x16xf32>
    %c0_11 = arith.constant 0 : index
    %c0_12 = arith.constant 0 : index
    %59 = vector.load %arg6[%c0_11, %c0_12] : memref<8x16xf32, #tpu.memory_space<vmem>>, vector<8x16xf32>
    %cst_13 = arith.constant dense<0.000000e+00> : vector<8x16xf32>
    %60 = tpu.matmul %53, %58, %cst_13 {dimension_numbers = #tpu.dot_dimension_numbers<[1], [0], [0], [1], [0, 0, 1, 1], [], []>} : vector<8x128xf32>, vector<128x16xf32>, vector<8x16xf32> -> vector<8x16xf32>
    %61 = arith.addf %59, %60 : vector<8x16xf32>
    %c0_14 = arith.constant 0 : index
    %c0_15 = arith.constant 0 : index
    %62 = vector.load %arg6[%c0_14, %c0_15] : memref<8x16xf32, #tpu.memory_space<vmem>>, vector<8x16xf32>
    tpu.vector_store %arg6[%c0_14, %c0_15], %61 {strides = array<i32>} : memref<8x16xf32, #tpu.memory_space<vmem>>, vector<8x16xf32>,
    return
  }
  func.func @transform_0(%arg0: i32) -> (i32, i32) {
    %c0_i32 = arith.constant 0 : i32
    %c0_i32_0 = arith.constant 0 : i32
    %c0_i32_1 = arith.constant 0 : i32
    return %c0_i32, %c0_i32_0 : i32, i32
  }
  func.func @transform_1(%arg0: i32) -> (i32, i32) {
    %c0_i32 = arith.constant 0 : i32
    %c0_i32_0 = arith.constant 0 : i32
    %c0_i32_1 = arith.constant 0 : i32
    return %c0_i32, %c0_i32_0 : i32, i32
  }
  func.func @transform_2(%arg0: i32) -> (i32, i32) {
    %c0_i32 = arith.constant 0 : i32
    %c0_i32_0 = arith.constant 0 : i32
    return %c0_i32, %arg0 : i32, i32
  }
  func.func @transform_3(%arg0: i32) -> (i32, i32) {
    %c0_i32 = arith.constant 0 : i32
    %c0_i32_0 = arith.constant 0 : i32
    return %c0_i32, %arg0 : i32, i32
  }
  func.func @transform_4(%arg0: i32) -> (i32, i32) {
    %c0_i32 = arith.constant 0 : i32
    %c0_i32_0 = arith.constant 0 : i32
    return %arg0, %c0_i32 : i32, i32
  }
  func.func @transform_5(%arg0: i32) -> (i32, i32) {
    %c0_i32 = arith.constant 0 : i32
    %c0_i32_0 = arith.constant 0 : i32
    %c0_i32_1 = arith.constant 0 : i32
    return %c0_i32, %c0_i32_0 : i32, i32
  }
}

</mosaic_0001>

<llo_original>
// kernel: tpu_custom_call.1
$region0: #{tpu_custom_call.1}
  #allocation0 [shape = 'u32[]', space=smem, size = 0x4, offset = 0x4, fixed_abs, tag = 'smem constant byte address 0x4 - core index']
  #allocation1 [shape = 'u32[144,128]{1,0:T(1,128)}', space=vmem, size = 0x12000, scoped, tag = 'internal scratch']
  %s0 = inlined_call_operand.vmem [shape: f32[8,16], index: 0, kind: input, shape index: {}]
  %s1 = inlined_call_operand.vmem [shape: f32[64,17], index: 1, kind: input, shape index: {}]
  %s2 = inlined_call_operand.vmem [shape: f32[17,128], index: 2, kind: input, shape index: {}]
  %s3 = inlined_call_operand.vmem [shape: s32[1,128], index: 3, kind: input, shape index: {}]
  %s4 = inlined_call_operand.vmem [shape: s32[128,1], index: 4, kind: input, shape index: {}]
  %s5 = inlined_call_operand.hbm [shape: f32[8,16], index: 5, kind: output, shape index: {}]
  %s6 = sld [smem:[#allocation0]]
  $region34: #{tpu_custom_call.1} parent=0
    _
  %s8 = ssub.s32 1, %s6
  %s9 = scalar_select 0, %s8, %s6
  $region1: #{tpu_custom_call.1} parent=0
    #allocation2 [shape = 'u8[4096]{0}', space=vmem, size = 0x1000, scoped, tag = 'output window, operand 0, single buffered']
    #allocation3 [shape = 's32[1]{0}', space=sflag, size = 0x4, scoped, tag = 'scoped memory for tpu_custom_call.1']
    %10 = vsyncpa [#allocation3], 0
    // Predicated region
    $region2: #{tpu_custom_call.1} parent=1 // pred_check
      _
    $region3: #{tpu_custom_call.1} parent=1 // pred_check_branch
      %12 = sbr.rel (0) target = $region5
    $region4: #{tpu_custom_call.1} parent=1 // pred_region
      _
    $region5: #{tpu_custom_call.1} parent=1 // pred_fallthru
      _
    // Predicated region
    $region6: #{tpu_custom_call.1} parent=1 // pred_check
      _
    $region7: #{tpu_custom_call.1} parent=1 // pred_check_branch
      %14 = sbr.rel (0) target = $region9
    $region8: #{tpu_custom_call.1} parent=1 // pred_region
      _
    $region9: #{tpu_custom_call.1} parent=1 // pred_fallthru
      _
    // Predicated region
    $region10: #{tpu_custom_call.1} parent=1 // pred_check
      _
    $region11: #{tpu_custom_call.1} parent=1 // pred_check_branch
      %16 = sbr.rel (0) target = $region13
    $region12: #{tpu_custom_call.1} parent=1 // pred_region
      _
    $region13: #{tpu_custom_call.1} parent=1 // pred_fallthru
      _
    // Predicated region
    $region14: #{tpu_custom_call.1} parent=1 // pred_check
      _
    $region15: #{tpu_custom_call.1} parent=1 // pred_check_branch
      %18 = sbr.rel (0) target = $region17
    $region16: #{tpu_custom_call.1} parent=1 // pred_region
      _
    $region17: #{tpu_custom_call.1} parent=1 // pred_fallthru
      _
    // Predicated region
    $region18: #{tpu_custom_call.1} parent=1 // pred_check
      _
    $region19: #{tpu_custom_call.1} parent=1 // pred_check_branch
      %20 = sbr.rel (0) target = $region21
    $region20: #{tpu_custom_call.1} parent=1 // pred_region
      _
    $region21: #{tpu_custom_call.1} parent=1 // pred_fallthru
      _
    %p21 = scmp.eq.s32.totalorder 0, 0
    // Predicated region
    $region22: #{tpu_custom_call.1} parent=1 // pred_check
      %p22 = pneg %p21
    $region23: #{tpu_custom_call.1} parent=1 // pred_check_branch
      %24 = sbr.rel (%p22) target = $region25
    $region24: #{tpu_custom_call.1} parent=1 // pred_region
      %vm25 = vcmask 130048
      %26 = vst.msk [vmem:[#allocation2] sm:$0xff] %vm25, 0.0
    $region25: #{tpu_custom_call.1} parent=1 // pred_fallthru
      _
    %v27 = vld [vmem:[%s0] sm:$0xff]
    %v28 = vld [vmem:[%s2] sm:$0xff]
    %v29 = vld [vmem:[%s2 + $0x8] sm:$0xff]
    %v30 = vld [vmem:[%s2 + $0x10] sm:$0x1]
    %v31 = vld [vmem:[%s1] sm:$0xff]
    %v32 = vld [vmem:[%s1 + $0x8] sm:$0xff]
    %v33 = vld [vmem:[%s1 + $0x10] sm:$0xff]
    %v34 = vld [vmem:[%s1 + $0x18] sm:$0xff]
    %v35 = vld [vmem:[%s1 + $0x20] sm:$0xff]
    %v36 = vld [vmem:[%s1 + $0x28] sm:$0xff]
    %v37 = vld [vmem:[%s1 + $0x30] sm:$0xff]
    %v38 = vld [vmem:[%s1 + $0x38] sm:$0xff]
    %v39 = vld [vmem:[%s3] sm:$0x1]
    %v40 = vld [vmem:[%s4] sm:$0xff]
    %v41 = vld [vmem:[%s4 + $0x8] sm:$0xff]
    %v42 = vld [vmem:[%s4 + $0x10] sm:$0xff]
    %v43 = vld [vmem:[%s4 + $0x18] sm:$0xff]
    %v44 = vld [vmem:[%s4 + $0x20] sm:$0xff]
    %v45 = vld [vmem:[%s4 + $0x28] sm:$0xff]
    %v46 = vld [vmem:[%s4 + $0x30] sm:$0xff]
    %v47 = vld [vmem:[%s4 + $0x38] sm:$0xff]
    %v48 = vld [vmem:[%s4 + $0x40] sm:$0xff]
    %v49 = vld [vmem:[%s4 + $0x48] sm:$0xff]
    %v50 = vld [vmem:[%s4 + $0x50] sm:$0xff]
    %v51 = vld [vmem:[%s4 + $0x58] sm:$0xff]
    %v52 = vld [vmem:[%s4 + $0x60] sm:$0xff]
    %v53 = vld [vmem:[%s4 + $0x68] sm:$0xff]
    %v54 = vld [vmem:[%s4 + $0x70] sm:$0xff]
    %v55 = vld [vmem:[%s4 + $0x78] sm:$0xff]
    %vm56 = vcmask 138240
    %v58 = vsel %vm56, %v31, 0
    %v61 = vsel %vm56, %v32, 0
    %v64 = vsel %vm56, %v33, 0
    %v67 = vsel %vm56, %v34, 0
    %v70 = vsel %vm56, %v35, 0
    %v73 = vsel %vm56, %v36, 0
    %v76 = vsel %vm56, %v37, 0
    %v79 = vsel %vm56, %v38, 0
    %vm81 = vcmask 1040384
    %v83 = vsel %vm81, %v30, 0
    %85 = vmatprep.subr.mxu0 0.0
    %86 = vmatpush1.msra.mxu0 %v28
    %87 = vmatprep.subr.mxu0 0.0
    %88 = vmatpush1.msra.mxu0 %v29
    %89 = vmatprep.subr.mxu0 0.0
    %90 = vmatpush1.msra.mxu0 %v83
    %91 = vmatprep.subr.mxu0 0.0
    %92 = vmatpush1.msra.mxu0 0.0
    %93 = vmatprep.subr.mxu0 0.0
    %94 = vmatpush1.msra.mxu0 0.0
    %95 = vmatprep.subr.mxu0 0.0
    %96 = vmatpush1.msra.mxu0 0.0
    %97 = vmatprep.subr.mxu0 0.0
    %98 = vmatpush1.msra.mxu0 0.0
    %99 = vmatprep.subr.mxu0 0.0
    %100 = vmatpush1.msra.mxu0 0.0
    %101 = vmatprep.subr.mxu0 0.0
    %102 = vmatpush1.msra.mxu0 0.0
    %103 = vmatprep.subr.mxu0 0.0
    %104 = vmatpush1.msra.mxu0 0.0
    %105 = vmatprep.subr.mxu0 0.0
    %106 = vmatpush1.msra.mxu0 0.0
    %107 = vmatprep.subr.mxu0 0.0
    %108 = vmatpush1.msra.mxu0 0.0
    %109 = vmatprep.subr.mxu0 0.0
    %110 = vmatpush1.msra.mxu0 0.0
    %111 = vmatprep.subr.mxu0 0.0
    %112 = vmatpush1.msra.mxu0 0.0
    %113 = vmatprep.subr.mxu0 0.0
    %114 = vmatpush1.msra.mxu0 0.0
    %115 = vmatprep.subr.mxu0 0.0
    %116 = vmatpush1.msra.mxu0 0.0
    %117 = vmatprep.subr.mxu0 0.0
    %118 = vmatpush1.msra.mxu0 0.0
    %119 = vmatprep.subr.mxu0 0.0
    %120 = vmatpush1.msra.mxu0 0.0
    %121 = vmatprep.subr.mxu0 0.0
    %122 = vmatpush1.msra.mxu0 0.0
    %123 = vmatprep.subr.mxu0 0.0
    %124 = vmatpush1.msra.mxu0 0.0
    %125 = vmatprep.subr.mxu0 0.0
    %126 = vmatpush1.msra.mxu0 0.0
    %127 = vmatprep.subr.mxu0 0.0
    %128 = vmatpush1.msra.mxu0 0.0
    %129 = vmatprep.subr.mxu0 0.0
    %130 = vmatpush1.msra.mxu0 0.0
    %131 = vmatprep.subr.mxu0 0.0
    %132 = vmatpush1.msra.mxu0 0.0
    %133 = vmatprep.subr.mxu0 0.0
    %134 = vmatpush1.msra.mxu0 0.0
    %135 = vmatprep.subr.mxu0 0.0
    %136 = vmatpush1.msra.mxu0 0.0
    %137 = vmatprep.subr.mxu0 0.0
    %138 = vmatpush1.msra.mxu0 0.0
    %139 = vmatprep.subr.mxu0 0.0
    %140 = vmatpush1.msra.mxu0 0.0
    %141 = vmatprep.subr.mxu0 0.0
    %142 = vmatpush1.msra.mxu0 0.0
    %143 = vmatprep.subr.mxu0 0.0
    %144 = vmatpush1.msra.mxu0 0.0
    %145 = vmatprep.subr.mxu0 0.0
    %146 = vmatpush1.msra.mxu0 0.0
    %147 = vmatprep.subr.mxu0 0.0
    %148 = vmatpush1.msra.mxu0 0.0
    %149 = vmatprep.mubr.f32.mxu0 0.0
    %150 = vmatmul.mubr.f32.gmra.mrb[0].mxu0 %v58
    %v151 = vpop.f32.mrb[0].mxu0
    %v152 = vadd.f32 0.0, %v151
    %v153 = vpop.f32.mrb[0].mxu0
    %154 = vmatprep.mubr.f32.mxu0 0.0
    %155 = vmatmul.mubr.f32.gmra.mrb[0].mxu0 %v61
    %v156 = vpop.f32.mrb[0].mxu0
    %v157 = vadd.f32 0.0, %v156
    %v158 = vpop.f32.mrb[0].mxu0
    %159 = vmatprep.mubr.f32.mxu0 0.0
    %160 = vmatmul.mubr.f32.gmra.mrb[0].mxu0 %v64
    %v161 = vpop.f32.mrb[0].mxu0
    %v162 = vadd.f32 0.0, %v161
    %v163 = vpop.f32.mrb[0].mxu0
    %164 = vmatprep.mubr.f32.mxu0 0.0
    %165 = vmatmul.mubr.f32.gmra.mrb[0].mxu0 %v67
    %v166 = vpop.f32.mrb[0].mxu0
    %v167 = vadd.f32 0.0, %v166
    %v168 = vpop.f32.mrb[0].mxu0
    %169 = vmatprep.mubr.f32.mxu0 0.0
    %170 = vmatmul.mubr.f32.gmra.mrb[0].mxu0 %v70
    %v171 = vpop.f32.mrb[0].mxu0
    %v172 = vadd.f32 0.0, %v171
    %v173 = vpop.f32.mrb[0].mxu0
    %174 = vmatprep.mubr.f32.mxu0 0.0
    %175 = vmatmul.mubr.f32.gmra.mrb[0].mxu0 %v73
    %v176 = vpop.f32.mrb[0].mxu0
    %v177 = vadd.f32 0.0, %v176
    %v178 = vpop.f32.mrb[0].mxu0
    %179 = vmatprep.mubr.f32.mxu0 0.0
    %180 = vmatmul.mubr.f32.gmra.mrb[0].mxu0 %v76
    %v181 = vpop.f32.mrb[0].mxu0
    %v182 = vadd.f32 0.0, %v181
    %v183 = vpop.f32.mrb[0].mxu0
    %184 = vmatprep.mubr.f32.mxu0 0.0
    %185 = vmatmul.mubr.f32.gmra.mrb[0].mxu0 %v79
    %v186 = vpop.f32.mrb[0].mxu0
    %v187 = vadd.f32 0.0, %v186
    %v188 = vpop.f32.mrb[0].mxu0
    %189 = vdwg.mxu0
    %v190 = vlaneseq
    %v191 = vshrl.u32 %v190, 7
    %v192 = vadd.s32 %v191, 8
    %v193 = vlaneseq
    %v194 = vshrl.u32 %v193, 7
    %v195 = vsub.s32 0, %v194
    %v196 = vrot.slane %v39, %v195
    %vm197 = vcmp.eq.s32.totalorder %v191, %v196
    %vm198 = vcmp.eq.s32.totalorder %v192, %v196
    %v199 = vsel %vm197, 1, 0
    %v200 = vsel %vm198, 1, 0
    %v201 = vcvt.s32.f32 %v199
    %v202 = vcvt.s32.f32 %v200
    %vm203 = vcmask 130048
    %v205 = vsel %vm203, %v27, 0
    %207 = vmatprep.subr.mxu0 0.0
    %208 = vmatpush1.msra.mxu0 %v201
    %209 = vmatprep.subr.mxu0 0.0
    %210 = vmatpush1.msra.mxu0 %v202
    %211 = vmatprep.subr.mxu0 0.0
    %212 = vmatpush1.msra.mxu0 0.0
    %213 = vmatprep.subr.mxu0 0.0
    %214 = vmatpush1.msra.mxu0 0.0
    %215 = vmatprep.subr.mxu0 0.0
    %216 = vmatpush1.msra.mxu0 0.0
    %217 = vmatprep.subr.mxu0 0.0
    %218 = vmatpush1.msra.mxu0 0.0
    %219 = vmatprep.subr.mxu0 0.0
    %220 = vmatpush1.msra.mxu0 0.0
    %221 = vmatprep.subr.mxu0 0.0
    %222 = vmatpush1.msra.mxu0 0.0
    %223 = vmatprep.subr.mxu0 0.0
    %224 = vmatpush1.msra.mxu0 0.0
    %225 = vmatprep.subr.mxu0 0.0
    %226 = vmatpush1.msra.mxu0 0.0
    %227 = vmatprep.subr.mxu0 0.0
    %228 = vmatpush1.msra.mxu0 0.0
    %229 = vmatprep.subr.mxu0 0.0
    %230 = vmatpush1.msra.mxu0 0.0
    %231 = vmatprep.subr.mxu0 0.0
    %232 = vmatpush1.msra.mxu0 0.0
    %233 = vmatprep.subr.mxu0 0.0
    %234 = vmatpush1.msra.mxu0 0.0
    %235 = vmatprep.subr.mxu0 0.0
    %236 = vmatpush1.msra.mxu0 0.0
    %237 = vmatprep.subr.mxu0 0.0
    %238 = vmatpush1.msra.mxu0 0.0
    %239 = vmatprep.subr.mxu0 0.0
    %240 = vmatpush1.msra.mxu0 0.0
    %241 = vmatprep.subr.mxu0 0.0
    %242 = vmatpush1.msra.mxu0 0.0
    %243 = vmatprep.subr.mxu0 0.0
    %244 = vmatpush1.msra.mxu0 0.0
    %245 = vmatprep.subr.mxu0 0.0
    %246 = vmatpush1.msra.mxu0 0.0
    %247 = vmatprep.subr.mxu0 0.0
    %248 = vmatpush1.msra.mxu0 0.0
    %249 = vmatprep.subr.mxu0 0.0
    %250 = vmatpush1.msra.mxu0 0.0
    %251 = vmatprep.subr.mxu0 0.0
    %252 = vmatpush1.msra.mxu0 0.0
    %253 = vmatprep.subr.mxu0 0.0
    %254 = vmatpush1.msra.mxu0 0.0
    %255 = vmatprep.subr.mxu0 0.0
    %256 = vmatpush1.msra.mxu0 0.0
    %257 = vmatprep.subr.mxu0 0.0
    %258 = vmatpush1.msra.mxu0 0.0
    %259 = vmatprep.subr.mxu0 0.0
    %260 = vmatpush1.msra.mxu0 0.0
    %261 = vmatprep.subr.mxu0 0.0
    %262 = vmatpush1.msra.mxu0 0.0
    %263 = vmatprep.subr.mxu0 0.0
    %264 = vmatpush1.msra.mxu0 0.0
    %265 = vmatprep.subr.mxu0 0.0
    %266 = vmatpush1.msra.mxu0 0.0
    %267 = vmatprep.subr.mxu0 0.0
    %268 = vmatpush1.msra.mxu0 0.0
    %269 = vmatprep.subr.mxu0 0.0
    %270 = vmatpush1.msra.mxu0 0.0
    %271 = vmatprep.mubr.f32.mxu0 0.0
    %272 = vmatmul.mubr.f32.gmra.mrb[0].mxu0 %v205
    %v273 = vpop.f32.mrb[0].mxu0
    %v274 = vadd.f32 0.0, %v273
    %v275 = vpop.f32.mrb[0].mxu0
    %276 = vdwg.mxu0
    %v277 = vlaneseq
    %v278 = vshrl.u32 %v277, 7
    %v279 = vsub.s32 0, %v278
    %v280 = vrot.slane %v274, %v279
    %v281 = vmul.f32 %v152, %v280
    %v282 = vlaneseq
    %v283 = vshrl.u32 %v282, 7
    %v284 = vsub.s32 1, %v283
    %v285 = vrot.slane %v274, %v284
    %v286 = vmul.f32 %v157, %v285
    %v287 = vlaneseq
    %v288 = vshrl.u32 %v287, 7
    %v289 = vsub.s32 2, %v288
    %v290 = vrot.slane %v274, %v289
    %v291 = vmul.f32 %v162, %v290
    %v292 = vlaneseq
    %v293 = vshrl.u32 %v292, 7
    %v294 = vsub.s32 3, %v293
    %v295 = vrot.slane %v274, %v294
    %v296 = vmul.f32 %v167, %v295
    %v297 = vlaneseq
    %v298 = vshrl.u32 %v297, 7
    %v299 = vsub.s32 4, %v298
    %v300 = vrot.slane %v274, %v299
    %v301 = vmul.f32 %v172, %v300
    %v302 = vlaneseq
    %v303 = vshrl.u32 %v302, 7
    %v304 = vsub.s32 5, %v303
    %v305 = vrot.slane %v274, %v304
    %v306 = vmul.f32 %v177, %v305
    %v307 = vlaneseq
    %v308 = vshrl.u32 %v307, 7
    %v309 = vsub.s32 6, %v308
    %v310 = vrot.slane %v274, %v309
    %v311 = vmul.f32 %v182, %v310
    %v312 = vlaneseq
    %v313 = vshrl.u32 %v312, 7
    %v314 = vsub.s32 7, %v313
    %v315 = vrot.slane %v274, %v314
    %v316 = vmul.f32 %v187, %v315
    %v317 = vadd.f32 %v281, %v286
    %v318 = vadd.f32 %v291, %v296
    %v319 = vadd.f32 %v301, %v306
    %v320 = vadd.f32 %v311, %v316
    %v321 = vadd.f32 %v317, %v318
    %v322 = vadd.f32 %v319, %v320
    %v323 = vadd.f32 %v321, %v322
    %v324 = vlaneseq
    %v325 = vand.u32 %v324, 127
    %326 = vset.pattern.permute.xlu0 0
    %327 = vperm.xlu0 %326, %v40
    %v328 = vpop.permute.xlu0 %327
    %329 = vset.pattern.permute.xlu0 0
    %330 = vperm.xlu0 %329, %v41
    %v331 = vpop.permute.xlu0 %330
    %332 = vset.pattern.permute.xlu0 0
    %333 = vperm.xlu0 %332, %v42
    %v334 = vpop.permute.xlu0 %333
    %335 = vset.pattern.permute.xlu0 0
    %336 = vperm.xlu0 %335, %v43
    %v337 = vpop.permute.xlu0 %336
    %338 = vset.pattern.permute.xlu0 0
    %339 = vperm.xlu0 %338, %v44
    %v340 = vpop.permute.xlu0 %339
    %341 = vset.pattern.permute.xlu0 0
    %342 = vperm.xlu0 %341, %v45
    %v343 = vpop.permute.xlu0 %342
    %344 = vset.pattern.permute.xlu0 0
    %345 = vperm.xlu0 %344, %v46
    %v346 = vpop.permute.xlu0 %345
    %347 = vset.pattern.permute.xlu0 0
    %348 = vperm.xlu0 %347, %v47
    %v349 = vpop.permute.xlu0 %348
    %350 = vset.pattern.permute.xlu0 0
    %351 = vperm.xlu0 %350, %v48
    %v352 = vpop.permute.xlu0 %351
    %353 = vset.pattern.permute.xlu0 0
    %354 = vperm.xlu0 %353, %v49
    %v355 = vpop.permute.xlu0 %354
    %356 = vset.pattern.permute.xlu0 0
    %357 = vperm.xlu0 %356, %v50
    %v358 = vpop.permute.xlu0 %357
    %359 = vset.pattern.permute.xlu0 0
    %360 = vperm.xlu0 %359, %v51
    %v361 = vpop.permute.xlu0 %360
    %362 = vset.pattern.permute.xlu0 0
    %363 = vperm.xlu0 %362, %v52
    %v364 = vpop.permute.xlu0 %363
    %365 = vset.pattern.permute.xlu0 0
    %366 = vperm.xlu0 %365, %v53
    %v367 = vpop.permute.xlu0 %366
    %368 = vset.pattern.permute.xlu0 0
    %369 = vperm.xlu0 %368, %v54
    %v370 = vpop.permute.xlu0 %369
    %371 = vset.pattern.permute.xlu0 0
    %372 = vperm.xlu0 %371, %v55
    %v373 = vpop.permute.xlu0 %372
    %vm374 = vcmp.eq.s32.totalorder %v328, %v325
    %vm375 = vcmp.eq.s32.totalorder %v331, %v325
    %vm376 = vcmp.eq.s32.totalorder %v334, %v325
    %vm377 = vcmp.eq.s32.totalorder %v337, %v325
    %vm378 = vcmp.eq.s32.totalorder %v340, %v325
    %vm379 = vcmp.eq.s32.totalorder %v343, %v325
    %vm380 = vcmp.eq.s32.totalorder %v346, %v325
    %vm381 = vcmp.eq.s32.totalorder %v349, %v325
    %vm382 = vcmp.eq.s32.totalorder %v352, %v325
    %vm383 = vcmp.eq.s32.totalorder %v355, %v325
    %vm384 = vcmp.eq.s32.totalorder %v358, %v325
    %vm385 = vcmp.eq.s32.totalorder %v361, %v325
    %vm386 = vcmp.eq.s32.totalorder %v364, %v325
    %vm387 = vcmp.eq.s32.totalorder %v367, %v325
    %vm388 = vcmp.eq.s32.totalorder %v370, %v325
    %vm389 = vcmp.eq.s32.totalorder %v373, %v325
    %v390 = vsel %vm374, 1, 0
    %v391 = vsel %vm375, 1, 0
    %v392 = vsel %vm376, 1, 0
    %v393 = vsel %vm377, 1, 0
    %v394 = vsel %vm378, 1, 0
    %v395 = vsel %vm379, 1, 0
    %v396 = vsel %vm380, 1, 0
    %v397 = vsel %vm381, 1, 0
    %v398 = vsel %vm382, 1, 0
    %v399 = vsel %vm383, 1, 0
    %v400 = vsel %vm384, 1, 0
    %v401 = vsel %vm385, 1, 0
    %v402 = vsel %vm386, 1, 0
    %v403 = vsel %vm387, 1, 0
    %v404 = vsel %vm388, 1, 0
    %v405 = vsel %vm389, 1, 0
    %v406 = vcvt.s32.f32 %v390
    %v407 = vcvt.s32.f32 %v391
    %v408 = vcvt.s32.f32 %v392
    %v409 = vcvt.s32.f32 %v393
    %v410 = vcvt.s32.f32 %v394
    %v411 = vcvt.s32.f32 %v395
    %v412 = vcvt.s32.f32 %v396
    %v413 = vcvt.s32.f32 %v397
    %v414 = vcvt.s32.f32 %v398
    %v415 = vcvt.s32.f32 %v399
    %v416 = vcvt.s32.f32 %v400
    %v417 = vcvt.s32.f32 %v401
    %v418 = vcvt.s32.f32 %v402
    %v419 = vcvt.s32.f32 %v403
    %v420 = vcvt.s32.f32 %v404
    %v421 = vcvt.s32.f32 %v405
    %v422 = vld [vmem:[#allocation2] sm:$0xff]
    %423 = vmatprep.subr.mxu0 0.0
    %424 = vmatpush1.msra.mxu0 %v406
    %425 = vmatprep.subr.mxu0 0.0
    %426 = vmatpush1.msra.mxu0 %v407
    %427 = vmatprep.subr.mxu0 0.0
    %428 = vmatpush1.msra.mxu0 %v408
    %429 = vmatprep.subr.mxu0 0.0
    %430 = vmatpush1.msra.mxu0 %v409
    %431 = vmatprep.subr.mxu0 0.0
    %432 = vmatpush1.msra.mxu0 %v410
    %433 = vmatprep.subr.mxu0 0.0
    %434 = vmatpush1.msra.mxu0 %v411
    %435 = vmatprep.subr.mxu0 0.0
    %436 = vmatpush1.msra.mxu0 %v412
    %437 = vmatprep.subr.mxu0 0.0
    %438 = vmatpush1.msra.mxu0 %v413
    %439 = vmatprep.subr.mxu0 0.0
    %440 = vmatpush1.msra.mxu0 %v414
    %441 = vmatprep.subr.mxu0 0.0
    %442 = vmatpush1.msra.mxu0 %v415
    %443 = vmatprep.subr.mxu0 0.0
    %444 = vmatpush1.msra.mxu0 %v416
    %445 = vmatprep.subr.mxu0 0.0
    %446 = vmatpush1.msra.mxu0 %v417
    %447 = vmatprep.subr.mxu0 0.0
    %448 = vmatpush1.msra.mxu0 %v418
    %449 = vmatprep.subr.mxu0 0.0
    %450 = vmatpush1.msra.mxu0 %v419
    %451 = vmatprep.subr.mxu0 0.0
    %452 = vmatpush1.msra.mxu0 %v420
    %453 = vmatprep.subr.mxu0 0.0
    %454 = vmatpush1.msra.mxu0 %v421
    %455 = vmatprep.subr.mxu0 0.0
    %456 = vmatpush1.msra.mxu0 0.0
    %457 = vmatprep.subr.mxu0 0.0
    %458 = vmatpush1.msra.mxu0 0.0
    %459 = vmatprep.subr.mxu0 0.0
    %460 = vmatpush1.msra.mxu0 0.0
    %461 = vmatprep.subr.mxu0 0.0
    %462 = vmatpush1.msra.mxu0 0.0
    %463 = vmatprep.subr.mxu0 0.0
    %464 = vmatpush1.msra.mxu0 0.0
    %465 = vmatprep.subr.mxu0 0.0
    %466 = vmatpush1.msra.mxu0 0.0
    %467 = vmatprep.subr.mxu0 0.0
    %468 = vmatpush1.msra.mxu0 0.0
    %469 = vmatprep.subr.mxu0 0.0
    %470 = vmatpush1.msra.mxu0 0.0
    %471 = vmatprep.subr.mxu0 0.0
    %472 = vmatpush1.msra.mxu0 0.0
    %473 = vmatprep.subr.mxu0 0.0
    %474 = vmatpush1.msra.mxu0 0.0
    %475 = vmatprep.subr.mxu0 0.0
    %476 = vmatpush1.msra.mxu0 0.0
    %477 = vmatprep.subr.mxu0 0.0
    %478 = vmatpush1.msra.mxu0 0.0
    %479 = vmatprep.subr.mxu0 0.0
    %480 = vmatpush1.msra.mxu0 0.0
    %481 = vmatprep.subr.mxu0 0.0
    %482 = vmatpush1.msra.mxu0 0.0
    %483 = vmatprep.subr.mxu0 0.0
    %484 = vmatpush1.msra.mxu0 0.0
    %485 = vmatprep.subr.mxu0 0.0
    %486 = vmatpush1.msra.mxu0 0.0
    %487 = vmatprep.mubr.f32.mxu0 0.0
    %488 = vmatmul.mubr.f32.gmra.mrb[0].mxu0 %v323
    %v489 = vpop.f32.mrb[0].mxu0
    %v490 = vadd.f32 0.0, %v489
    %v491 = vpop.f32.mrb[0].mxu0
    %492 = vdwg.mxu0
    %v493 = vadd.f32 %v422, %v490
    %494 = vst.msk [vmem:[#allocation2] sm:$0xff] %vm203, %v493
    // Predicated region
    $region26: #{tpu_custom_call.1} parent=1 // pred_check
      _
    $region27: #{tpu_custom_call.1} parent=1 // pred_check_branch
      %496 = sbr.rel (0) target = $region29
    $region28: #{tpu_custom_call.1} parent=1 // pred_region
      %s498 = ssub.s32 128, 128
      %499 = vsyncadd [#allocation3], %s498
      %s501 = sshll.u32 [#allocation2], 4
      %s502 = int_to_ptr.vmem [resolvable:$true] %s501
      %504 = dma.vmem_to_hbm [thread:$0]  %s502, 128, %s5, [#allocation3]
    $region29: #{tpu_custom_call.1} parent=1 // pred_fallthru
      _
    // Predicated region
    $region30: #{tpu_custom_call.1} parent=1 // pred_check
      _
    $region31: #{tpu_custom_call.1} parent=1 // pred_check_branch
      %506 = sbr.rel (0) target = $region33
    $region32: #{tpu_custom_call.1} parent=1 // pred_region
      %507 = dma.done [#allocation3], 128
    $region33: #{tpu_custom_call.1} parent=1 // pred_fallthru
      _
    %508 = vsyncpa [#allocation3], 1

</llo_original>
